<compile_context>
chip_gen: v6e
topology: v6e:2x2x1
jax: 0.10.0
libtpu: 0.0.40
codegen_flags: <defaults>
</compile_context>

<pallas_src>
import functools

import jax
import jax.numpy as jnp
from jax.experimental import pallas as pl
from jax.experimental.pallas import tpu as pltpu

_LANE = 128  # lane width is 128 on all TPU generations


def _round_up(n, m):
    return ((n + m - 1) // m) * m


def _projection_head_kernel(x_ref, w1_ref, b1_ref, w2_ref, b2_ref, o_ref):
    """One batch tile of:  relu(x @ W1 + b1) @ W2 + b2."""
    x = x_ref[...]                       # native dtype -> fast MXU path

    # Linear 1 (MXU, f32 accumulation) + bias + ReLU (VPU).
    h = jnp.dot(x, w1_ref[...], preferred_element_type=jnp.float32)
    h = jnp.maximum(h + b1_ref[...], 0.0)        # b1 is (1, H) -> broadcast

    # Feed the second matmul in the input dtype (bf16 inputs keep the fast
    # MXU path); accumulation stays f32.
    h = h.astype(x.dtype)
    y = jnp.dot(h, w2_ref[...], preferred_element_type=jnp.float32)
    y = y + b2_ref[...]                          # b2 is (1, O) -> broadcast

    o_ref[...] = y.astype(o_ref.dtype)


@functools.partial(jax.jit, static_argnames=("block_b",))
def projection_head_forward(x, w1, b1, w2, b2, *, block_b=256):
    """x: [..., input_dim]; w1: [input_dim, hidden]; w2: [hidden, output]."""
    orig_shape = x.shape
    input_dim = orig_shape[-1]
    if x.ndim != 2:
        x = x.reshape(-1, input_dim)          # nn.Linear: flatten leading dims
    B = x.shape[0]
    hidden_dim = w1.shape[1]
    output_dim = w2.shape[1]

    # --- lane-dense padding of the feature dims (zeros -> math unchanged) ---
    h_pad = _round_up(hidden_dim, _LANE)
    o_pad = _round_up(output_dim, _LANE)

    w1p = jnp.pad(w1, ((0, 0), (0, h_pad - hidden_dim)))
    b1p = jnp.pad(b1, (0, h_pad - hidden_dim)).reshape(1, h_pad)
    w2p = jnp.pad(w2, ((0, h_pad - hidden_dim), (0, o_pad - output_dim)))
    b2p = jnp.pad(b2, (0, o_pad - output_dim)).reshape(1, o_pad)

    # --- batch tile selection -----------------------------------------------
    tb = min(block_b, B)
    if tb < B:
        tb = max(8, (tb // 8) * 8)            # sublane-aligned tile
    elif B >= 256:
        # One tile would cover the whole (large) batch; split so v7x's two
        # TensorCores both get a grid step (inert on single-TC v5e/v6e).
        tb = _round_up((B + 1) // 2, 8)
    grid = (pl.cdiv(B, tb),)

    # --- VMEM budget & cost estimate ---------------------------------------
    bpe = jnp.dtype(x.dtype).itemsize
    wpe = jnp.dtype(w1p.dtype).itemsize
    weight_bytes = (input_dim * h_pad + h_pad * o_pad + h_pad + o_pad) * wpe
    needed = (
        2 * tb * input_dim * bpe              # x tile, double-buffered
        + 2 * tb * o_pad * bpe                # out tile, double-buffered
        + weight_bytes                        # weights/biases, single-buffered
        + tb * (h_pad + o_pad) * 4            # f32 intermediates in the kernel
    )
    vmem_limit = int(min(64 << 20, max(2 * needed + (1 << 20), 32 << 20)))

    cost = pl.CostEstimate(
        flops=int(2 * B * (input_dim * h_pad + h_pad * o_pad)),
        transcendentals=0,
        bytes_accessed=int((B * input_dim + B * o_pad) * bpe + weight_bytes),
    )

    # Weights/biases never change across grid steps -> single-buffer them.
    const_buf = pl.Buffered(1)

    out_padded = pl.pallas_call(
        _projection_head_kernel,
        out_shape=jax.ShapeDtypeStruct((B, o_pad), x.dtype),
        grid_spec=pltpu.PrefetchScalarGridSpec(
            num_scalar_prefetch=0,
            grid=grid,
            in_specs=[
                pl.BlockSpec((tb, input_dim), lambda i: (i, 0)),      # x tile
                pl.BlockSpec((input_dim, h_pad), lambda i: (0, 0),
                             pipeline_mode=const_buf),                # W1
                pl.BlockSpec((1, h_pad), lambda i: (0, 0),
                             pipeline_mode=const_buf),                # b1
                pl.BlockSpec((h_pad, o_pad), lambda i: (0, 0),
                             pipeline_mode=const_buf),                # W2
                pl.BlockSpec((1, o_pad), lambda i: (0, 0),
                             pipeline_mode=const_buf),                # b2
            ],
            out_specs=pl.BlockSpec((tb, o_pad), lambda i: (i, 0)),
        ),
        compiler_params=pltpu.CompilerParams(
            dimension_semantics=("parallel",),
            vmem_limit_bytes=vmem_limit,
        ),
        cost_estimate=cost,
    )(x, w1p, b1p, w2p, b2p)

    # Strip the lane padding off the output (no-op when already aligned) and
    # restore leading batch dims.
    out = out_padded[:, :output_dim]
    return out.reshape(*orig_shape[:-1], output_dim)


def init_projection_head_params(key, input_dim, hidden_dim, output_dim,
                                dtype=jnp.float32):
    """PyTorch-style uniform init; weights returned in [in, out] layout."""
    k1, k2, k3, k4 = jax.random.split(key, 4)
    bound1 = 1.0 / jnp.sqrt(input_dim)
    bound2 = 1.0 / jnp.sqrt(hidden_dim)
    w1_oi = jax.random.uniform(k1, (hidden_dim, input_dim), dtype,
                               minval=-bound1, maxval=bound1)
    b1 = jax.random.uniform(k2, (hidden_dim,), dtype,
                            minval=-bound1, maxval=bound1)
    w2_oi = jax.random.uniform(k3, (output_dim, hidden_dim), dtype,
                               minval=-bound2, maxval=bound2)
    b2 = jax.random.uniform(k4, (output_dim,), dtype,
                            minval=-bound2, maxval=bound2)
    return w1_oi.T, b1, w2_oi.T, b2


if __name__ == "__main__":
    # Small shapes consistent with the module's forward:
    # x: [batch, input_dim] -> [batch, output_dim]
    batch, input_dim, hidden_dim, output_dim = 8, 32, 64, 16

    key = jax.random.PRNGKey(0)
    kx, kp = jax.random.split(key)
    x = jax.random.normal(kx, (batch, input_dim), jnp.float32)
    w1, b1, w2, b2 = init_projection_head_params(
        kp, input_dim, hidden_dim, output_dim)

    out = projection_head_forward(x, w1, b1, w2, b2)
    out = jax.block_until_ready(out)

    # Pure-JAX reference for a sanity check.
    ref = jnp.maximum(x @ w1 + b1, 0.0) @ w2 + b2
    assert out.shape == (batch, output_dim)
    assert jnp.allclose(out, ref, atol=1e-5, rtol=1e-5)

    print("KERNEL_OK")
</pallas_src>

<mosaic_0001>
module attributes {stable_mosaic.version = 11 : i64} {
  func.func @_projection_head_kernel(%arg0: i32, %arg1: memref<8x32xf32, #tpu.memory_space<vmem>>, %arg2: memref<32x128xf32, #tpu.memory_space<vmem>>, %arg3: memref<1x128xf32, #tpu.memory_space<vmem>>, %arg4: memref<128x128xf32, #tpu.memory_space<vmem>>, %arg5: memref<1x128xf32, #tpu.memory_space<vmem>>, %arg6: memref<8x128xf32, #tpu.memory_space<vmem>>) attributes {dimension_semantics = [#tpu.dimension_semantics<parallel>], iteration_bounds = array<i64: 1>, scalar_prefetch = 0 : i64, scratch_operands = 0 : i64, tpu.core_type = #tpu.core_type<tc>, window_params = [{transform_indices = @transform_0, window_bounds = array<i64: 8, 32>}, {pipeline_mode = #tpu.pipeline_mode<synchronous>, transform_indices = @transform_1, window_bounds = array<i64: 32, 128>}, {pipeline_mode = #tpu.pipeline_mode<synchronous>, transform_indices = @transform_2, window_bounds = array<i64: 1, 128>}, {pipeline_mode = #tpu.pipeline_mode<synchronous>, transform_indices = @transform_3, window_bounds = array<i64: 128, 128>}, {pipeline_mode = #tpu.pipeline_mode<synchronous>, transform_indices = @transform_4, window_bounds = array<i64: 1, 128>}, {transform_indices = @transform_5, window_bounds = array<i64: 8, 128>}]} {
    %c0 = arith.constant 0 : index
    %c0_0 = arith.constant 0 : index
    %0 = vector.load %arg1[%c0, %c0_0] : memref<8x32xf32, #tpu.memory_space<vmem>>, vector<8x32xf32>
    %c0_1 = arith.constant 0 : index
    %c0_2 = arith.constant 0 : index
    %1 = vector.load %arg2[%c0_1, %c0_2] : memref<32x128xf32, #tpu.memory_space<vmem>>, vector<32x128xf32>
    %cst = arith.constant dense<0.000000e+00> : vector<8x128xf32>
    %2 = tpu.matmul %0, %1, %cst {dimension_numbers = #tpu.dot_dimension_numbers<[1], [0], [0], [1], [0, 0, 1, 1], [], []>} : vector<8x32xf32>, vector<32x128xf32>, vector<8x128xf32> -> vector<8x128xf32>
    %c0_3 = arith.constant 0 : index
    %c0_4 = arith.constant 0 : index
    %3 = vector.load %arg3[%c0_3, %c0_4] : memref<1x128xf32, #tpu.memory_space<vmem>>, vector<1x128xf32>
    %4 = vector.broadcast %3 : vector<1x128xf32> to vector<8x128xf32>
    %5 = arith.addf %2, %4 : vector<8x128xf32>
    %cst_5 = arith.constant 0.000000e+00 : f32
    %6 = vector.broadcast %cst_5 : f32 to vector<8x128xf32>
    %7 = arith.maximumf %5, %6 : vector<8x128xf32>
    %c0_6 = arith.constant 0 : index
    %c0_7 = arith.constant 0 : index
    %8 = vector.load %arg4[%c0_6, %c0_7] : memref<128x128xf32, #tpu.memory_space<vmem>>, vector<128x128xf32>
    %cst_8 = arith.constant dense<0.000000e+00> : vector<8x128xf32>
    %9 = tpu.matmul %7, %8, %cst_8 {dimension_numbers = #tpu.dot_dimension_numbers<[1], [0], [0], [1], [0, 0, 1, 1], [], []>} : vector<8x128xf32>, vector<128x128xf32>, vector<8x128xf32> -> vector<8x128xf32>
    %c0_9 = arith.constant 0 : index
    %c0_10 = arith.constant 0 : index
    %10 = vector.load %arg5[%c0_9, %c0_10] : memref<1x128xf32, #tpu.memory_space<vmem>>, vector<1x128xf32>
    %11 = vector.broadcast %10 : vector<1x128xf32> to vector<8x128xf32>
    %12 = arith.addf %9, %11 : vector<8x128xf32>
    %c0_11 = arith.constant 0 : index
    %c0_12 = arith.constant 0 : index
    %13 = vector.load %arg6[%c0_11, %c0_12] : memref<8x128xf32, #tpu.memory_space<vmem>>, vector<8x128xf32>
    tpu.vector_store %arg6[%c0_11, %c0_12], %12 {strides = array<i32>} : memref<8x128xf32, #tpu.memory_space<vmem>>, vector<8x128xf32>,
    return
  }
  func.func @transform_0(%arg0: i32) -> (i32, i32) {
    %c0_i32 = arith.constant 0 : i32
    %c0_i32_0 = arith.constant 0 : i32
    return %arg0, %c0_i32 : i32, i32
  }
  func.func @transform_1(%arg0: i32) -> (i32, i32) {
    %c0_i32 = arith.constant 0 : i32
    %c0_i32_0 = arith.constant 0 : i32
    %c0_i32_1 = arith.constant 0 : i32
    return %c0_i32, %c0_i32_0 : i32, i32
  }
  func.func @transform_2(%arg0: i32) -> (i32, i32) {
    %c0_i32 = arith.constant 0 : i32
    %c0_i32_0 = arith.constant 0 : i32
    %c0_i32_1 = arith.constant 0 : i32
    return %c0_i32, %c0_i32_0 : i32, i32
  }
  func.func @transform_3(%arg0: i32) -> (i32, i32) {
    %c0_i32 = arith.constant 0 : i32
    %c0_i32_0 = arith.constant 0 : i32
    %c0_i32_1 = arith.constant 0 : i32
    return %c0_i32, %c0_i32_0 : i32, i32
  }
  func.func @transform_4(%arg0: i32) -> (i32, i32) {
    %c0_i32 = arith.constant 0 : i32
    %c0_i32_0 = arith.constant 0 : i32
    %c0_i32_1 = arith.constant 0 : i32
    return %c0_i32, %c0_i32_0 : i32, i32
  }
  func.func @transform_5(%arg0: i32) -> (i32, i32) {
    %c0_i32 = arith.constant 0 : i32
    %c0_i32_0 = arith.constant 0 : i32
    return %arg0, %c0_i32 : i32, i32
  }
}

</mosaic_0001>

<llo_original>
// kernel: projection_head_forward.1
$region0: #{projection_head_forward.1}
  #allocation0 [shape = 'u32[]', space=smem, size = 0x4, offset = 0x4, fixed_abs, tag = 'smem constant byte address 0x4 - core index']
  #allocation1 [shape = 'u32[144,128]{1,0:T(1,128)}', space=vmem, size = 0x12000, scoped, tag = 'internal scratch']
  %s0 = inlined_call_operand.vmem [shape: f32[8,32], index: 0, kind: input, shape index: {}]
  %s1 = inlined_call_operand.vmem [shape: f32[32,128], index: 1, kind: input, shape index: {}]
  %s2 = inlined_call_operand.vmem [shape: f32[1,128], index: 2, kind: input, shape index: {}]
  %s3 = inlined_call_operand.vmem [shape: f32[128,128], index: 3, kind: input, shape index: {}]
  %s4 = inlined_call_operand.vmem [shape: f32[1,128], index: 4, kind: input, shape index: {}]
  %s5 = inlined_call_operand.hbm [shape: f32[8,128], index: 5, kind: output, shape index: {}]
  %s6 = sld [smem:[#allocation0]]
  $region30: #{projection_head_forward.1} parent=0
    _
  %s8 = ssub.s32 1, %s6
  %s9 = scalar_select 0, %s8, %s6
  $region1: #{projection_head_forward.1} parent=0
    #allocation2 [shape = 'u8[4096]{0}', space=vmem, size = 0x1000, scoped, tag = 'output window, operand 0, single buffered']
    #allocation3 [shape = 's32[1]{0}', space=sflag, size = 0x4, scoped, tag = 'scoped memory for projection_head_forward.1']
    %10 = vsyncpa [#allocation3], 0
    // Predicated region
    $region2: #{projection_head_forward.1} parent=1 // pred_check
      _
    $region3: #{projection_head_forward.1} parent=1 // pred_check_branch
      %12 = sbr.rel (0) target = $region5
    $region4: #{projection_head_forward.1} parent=1 // pred_region
      _
    $region5: #{projection_head_forward.1} parent=1 // pred_fallthru
      _
    // Predicated region
    $region6: #{projection_head_forward.1} parent=1 // pred_check
      _
    $region7: #{projection_head_forward.1} parent=1 // pred_check_branch
      %14 = sbr.rel (0) target = $region9
    $region8: #{projection_head_forward.1} parent=1 // pred_region
      _
    $region9: #{projection_head_forward.1} parent=1 // pred_fallthru
      _
    // Predicated region
    $region10: #{projection_head_forward.1} parent=1 // pred_check
      _
    $region11: #{projection_head_forward.1} parent=1 // pred_check_branch
      %16 = sbr.rel (0) target = $region13
    $region12: #{projection_head_forward.1} parent=1 // pred_region
      _
    $region13: #{projection_head_forward.1} parent=1 // pred_fallthru
      _
    // Predicated region
    $region14: #{projection_head_forward.1} parent=1 // pred_check
      _
    $region15: #{projection_head_forward.1} parent=1 // pred_check_branch
      %18 = sbr.rel (0) target = $region17
    $region16: #{projection_head_forward.1} parent=1 // pred_region
      _
    $region17: #{projection_head_forward.1} parent=1 // pred_fallthru
      _
    // Predicated region
    $region18: #{projection_head_forward.1} parent=1 // pred_check
      _
    $region19: #{projection_head_forward.1} parent=1 // pred_check_branch
      %20 = sbr.rel (0) target = $region21
    $region20: #{projection_head_forward.1} parent=1 // pred_region
      _
    $region21: #{projection_head_forward.1} parent=1 // pred_fallthru
      _
    %v21 = vld [vmem:[%s0] sm:$0xff]
    %v22 = vld [vmem:[%s1] sm:$0xff]
    %v23 = vld [vmem:[%s1 + $0x8] sm:$0xff]
    %v24 = vld [vmem:[%s1 + $0x10] sm:$0xff]
    %v25 = vld [vmem:[%s1 + $0x18] sm:$0xff]
    %v26 = vld [vmem:[%s2] sm:$0x1]
    %v28 = vlaneseq
    %v29 = vshrl.u32 %v28, 7
    %v30 = vsub.s32 0, %v29
    %v31 = vrot.slane %v26, %v30
    %vm33 = vcmask 261120
    %v35 = vsel %vm33, %v21, 0
    %37 = vmatprep.subr.mxu0 0.0
    %38 = vmatpush1.msra.mxu0 0.0
    %39 = vmatprep.subr.mxu0 0.0
    %40 = vmatpush1.msra.mxu0 0.0
    %41 = vmatprep.subr.mxu0 0.0
    %42 = vmatpush1.msra.mxu0 0.0
    %43 = vmatprep.subr.mxu0 0.0
    %44 = vmatpush1.msra.mxu0 0.0
    %45 = vmatprep.subr.mxu0 0.0
    %46 = vmatpush1.msra.mxu0 0.0
    %47 = vmatprep.subr.mxu0 0.0
    %48 = vmatpush1.msra.mxu0 0.0
    %49 = vmatprep.subr.mxu0 0.0
    %50 = vmatpush1.msra.mxu0 0.0
    %51 = vmatprep.subr.mxu0 0.0
    %52 = vmatpush1.msra.mxu0 0.0
    %53 = vmatprep.subr.mxu0 0.0
    %54 = vmatpush1.msra.mxu0 0.0
    %55 = vmatprep.subr.mxu0 0.0
    %56 = vmatpush1.msra.mxu0 0.0
    %57 = vmatprep.subr.mxu0 0.0
    %58 = vmatpush1.msra.mxu0 0.0
    %59 = vmatprep.subr.mxu0 0.0
    %60 = vmatpush1.msra.mxu0 0.0
    %61 = vmatprep.subr.mxu0 0.0
    %62 = vmatpush1.msra.mxu0 %v25
    %63 = vmatprep.subr.mxu0 0.0
    %64 = vmatpush1.msra.mxu0 %v24
    %65 = vmatprep.subr.mxu0 0.0
    %66 = vmatpush1.msra.mxu0 %v23
    %67 = vmatprep.subr.mxu0 0.0
    %68 = vmatpush1.msra.mxu0 %v22
    %69 = vmatprep.subr.mxu0 0.0
    %70 = vmatpush2.msra.mxu0 0.0
    %71 = vmatprep.subr.mxu0 0.0
    %72 = vmatpush2.msra.mxu0 0.0
    %73 = vmatprep.subr.mxu0 0.0
    %74 = vmatpush2.msra.mxu0 0.0
    %75 = vmatprep.subr.mxu0 0.0
    %76 = vmatpush2.msra.mxu0 0.0
    %77 = vmatprep.subr.mxu0 0.0
    %78 = vmatpush2.msra.mxu0 0.0
    %79 = vmatprep.subr.mxu0 0.0
    %80 = vmatpush2.msra.mxu0 0.0
    %81 = vmatprep.subr.mxu0 0.0
    %82 = vmatpush2.msra.mxu0 0.0
    %83 = vmatprep.subr.mxu0 0.0
    %84 = vmatpush2.msra.mxu0 0.0
    %85 = vmatprep.subr.mxu0 0.0
    %86 = vmatpush2.msra.mxu0 0.0
    %87 = vmatprep.subr.mxu0 0.0
    %88 = vmatpush2.msra.mxu0 0.0
    %89 = vmatprep.subr.mxu0 0.0
    %90 = vmatpush2.msra.mxu0 0.0
    %91 = vmatprep.subr.mxu0 0.0
    %92 = vmatpush2.msra.mxu0 0.0
    %93 = vmatprep.subr.mxu0 0.0
    %94 = vmatpush2.msra.mxu0 0.0
    %95 = vmatprep.subr.mxu0 0.0
    %96 = vmatpush2.msra.mxu0 0.0
    %97 = vmatprep.subr.mxu0 0.0
    %98 = vmatpush2.msra.mxu0 0.0
    %99 = vmatprep.subr.mxu0 0.0
    %100 = vmatpush2.msra.mxu0 0.0
    %101 = vmatprep.mubr.f32.mxu0 0.0
    %102 = vmatmul.mubr.f32.gmra.mxu0 %v35
    %v103 = vpop.f32.mrf.mxu0
    %v104 = vadd.f32 %v31, %v103
    %v105 = vpop.f32.mrf.mxu0
    %106 = vdwg.mxu0
    %v107 = vmax.f32 %v104, 0.0
    %v108 = vld [vmem:[%s3] sm:$0xff]
    %v109 = vld [vmem:[%s3 + $0x8] sm:$0xff]
    %v110 = vld [vmem:[%s3 + $0x10] sm:$0xff]
    %v111 = vld [vmem:[%s3 + $0x18] sm:$0xff]
    %v112 = vld [vmem:[%s3 + $0x20] sm:$0xff]
    %v113 = vld [vmem:[%s3 + $0x28] sm:$0xff]
    %v114 = vld [vmem:[%s3 + $0x30] sm:$0xff]
    %v115 = vld [vmem:[%s3 + $0x38] sm:$0xff]
    %v116 = vld [vmem:[%s3 + $0x40] sm:$0xff]
    %v117 = vld [vmem:[%s3 + $0x48] sm:$0xff]
    %v118 = vld [vmem:[%s3 + $0x50] sm:$0xff]
    %v119 = vld [vmem:[%s3 + $0x58] sm:$0xff]
    %v120 = vld [vmem:[%s3 + $0x60] sm:$0xff]
    %v121 = vld [vmem:[%s3 + $0x68] sm:$0xff]
    %v122 = vld [vmem:[%s3 + $0x70] sm:$0xff]
    %v123 = vld [vmem:[%s3 + $0x78] sm:$0xff]
    %v124 = vld [vmem:[%s4] sm:$0x1]
    %v126 = vlaneseq
    %v127 = vshrl.u32 %v126, 7
    %v128 = vsub.s32 0, %v127
    %v129 = vrot.slane %v124, %v128
    %131 = vmatprep.subr.mxu0 0.0
    %132 = vmatpush1.msra.mxu0 %v123
    %133 = vmatprep.subr.mxu0 0.0
    %134 = vmatpush1.msra.mxu0 %v122
    %135 = vmatprep.subr.mxu0 0.0
    %136 = vmatpush1.msra.mxu0 %v121
    %137 = vmatprep.subr.mxu0 0.0
    %138 = vmatpush1.msra.mxu0 %v120
    %139 = vmatprep.subr.mxu0 0.0
    %140 = vmatpush1.msra.mxu0 %v119
    %141 = vmatprep.subr.mxu0 0.0
    %142 = vmatpush1.msra.mxu0 %v118
    %143 = vmatprep.subr.mxu0 0.0
    %144 = vmatpush1.msra.mxu0 %v117
    %145 = vmatprep.subr.mxu0 0.0
    %146 = vmatpush1.msra.mxu0 %v116
    %147 = vmatprep.subr.mxu0 0.0
    %148 = vmatpush1.msra.mxu0 %v115
    %149 = vmatprep.subr.mxu0 0.0
    %150 = vmatpush1.msra.mxu0 %v114
    %151 = vmatprep.subr.mxu0 0.0
    %152 = vmatpush1.msra.mxu0 %v113
    %153 = vmatprep.subr.mxu0 0.0
    %154 = vmatpush1.msra.mxu0 %v112
    %155 = vmatprep.subr.mxu0 0.0
    %156 = vmatpush1.msra.mxu0 %v111
    %157 = vmatprep.subr.mxu0 0.0
    %158 = vmatpush1.msra.mxu0 %v110
    %159 = vmatprep.subr.mxu0 0.0
    %160 = vmatpush1.msra.mxu0 %v109
    %161 = vmatprep.subr.mxu0 0.0
    %162 = vmatpush1.msra.mxu0 %v108
    %163 = vmatprep.subr.mxu0 0.0
    %164 = vmatpush2.msra.mxu0 0.0
    %165 = vmatprep.subr.mxu0 0.0
    %166 = vmatpush2.msra.mxu0 0.0
    %167 = vmatprep.subr.mxu0 0.0
    %168 = vmatpush2.msra.mxu0 0.0
    %169 = vmatprep.subr.mxu0 0.0
    %170 = vmatpush2.msra.mxu0 0.0
    %171 = vmatprep.subr.mxu0 0.0
    %172 = vmatpush2.msra.mxu0 0.0
    %173 = vmatprep.subr.mxu0 0.0
    %174 = vmatpush2.msra.mxu0 0.0
    %175 = vmatprep.subr.mxu0 0.0
    %176 = vmatpush2.msra.mxu0 0.0
    %177 = vmatprep.subr.mxu0 0.0
    %178 = vmatpush2.msra.mxu0 0.0
    %179 = vmatprep.subr.mxu0 0.0
    %180 = vmatpush2.msra.mxu0 0.0
    %181 = vmatprep.subr.mxu0 0.0
    %182 = vmatpush2.msra.mxu0 0.0
    %183 = vmatprep.subr.mxu0 0.0
    %184 = vmatpush2.msra.mxu0 0.0
    %185 = vmatprep.subr.mxu0 0.0
    %186 = vmatpush2.msra.mxu0 0.0
    %187 = vmatprep.subr.mxu0 0.0
    %188 = vmatpush2.msra.mxu0 0.0
    %189 = vmatprep.subr.mxu0 0.0
    %190 = vmatpush2.msra.mxu0 0.0
    %191 = vmatprep.subr.mxu0 0.0
    %192 = vmatpush2.msra.mxu0 0.0
    %193 = vmatprep.subr.mxu0 0.0
    %194 = vmatpush2.msra.mxu0 0.0
    %195 = vmatprep.mubr.f32.mxu0 0.0
    %196 = vmatmul.mubr.f32.gmra.mxu0 %v107
    %v197 = vpop.f32.mrf.mxu0
    %v198 = vadd.f32 %v129, %v197
    %v199 = vpop.f32.mrf.mxu0
    %200 = vdwg.mxu0
    %201 = vst [vmem:[#allocation2] sm:$0xff] %v198
    // Predicated region
    $region22: #{projection_head_forward.1} parent=1 // pred_check
      _
    $region23: #{projection_head_forward.1} parent=1 // pred_check_branch
      %203 = sbr.rel (0) target = $region25
    $region24: #{projection_head_forward.1} parent=1 // pred_region
      %s205 = ssub.s32 128, 128
      %206 = vsyncadd [#allocation3], %s205
      %s208 = sshll.u32 [#allocation2], 4
      %s209 = int_to_ptr.vmem [resolvable:$true] %s208
      %211 = dma.vmem_to_hbm [thread:$0]  %s209, 128, %s5, [#allocation3]
    $region25: #{projection_head_forward.1} parent=1 // pred_fallthru
      _
    // Predicated region
    $region26: #{projection_head_forward.1} parent=1 // pred_check
      _
    $region27: #{projection_head_forward.1} parent=1 // pred_check_branch
      %213 = sbr.rel (0) target = $region29
    $region28: #{projection_head_forward.1} parent=1 // pred_region
      %214 = dma.done [#allocation3], 128
    $region29: #{projection_head_forward.1} parent=1 // pred_fallthru
      _
    %215 = vsyncpa [#allocation3], 1

</llo_original>
